<compile_context>
chip_gen: v7x
topology: tpu7x:2x2x1
jax: 0.10.0
libtpu: 0.0.40
codegen_flags: <defaults>
</compile_context>

<pallas_src>
import functools

import jax
import jax.numpy as jnp
from jax import lax
from jax.experimental import pallas as pl
from jax.experimental.pallas import tpu as pltpu


def _round_up(x, m):
    return ((x + m - 1) // m) * m


def pn_neuron_kernel(a_ref, b_ref, c_ref, x_ref, o_ref):
    """o[0, n] = x_n^T A x_n + b . x_n + c  for every row n of the batch tile.

    a_ref : (D, D)   VMEM  quadratic coefficients (resident across the grid)
    b_ref : (1, D)   VMEM  linear coefficients (resident across the grid)
    c_ref : (1, 1)   SMEM  constant term
    x_ref : (TB, D)  VMEM  streamed batch tile, native row-major layout (no HBM transpose)
    o_ref : (1, TB)  VMEM  lane-dense output tile (batch on lanes -> unmasked stores)
    """
    x = x_ref[...].astype(jnp.float32)                                      # (TB, D)
    # y[n, j] = (x_n^T A)[j] + b[j]
    y = jnp.dot(x, a_ref[...], preferred_element_type=jnp.float32) + b_ref[...]
    prod = x * y                                                            # (TB, D)
    # Contract the feature axis while moving batch onto lanes:
    #   quad[0, n] = sum_j prod[n, j]
    # NT dot_general (contract both minor dims) -- the same well-supported pattern as
    # flash-attention's q @ k^T; avoids materializing an explicit (D, TB) XLU transpose.
    ones_row = jnp.ones((1, prod.shape[1]), dtype=jnp.float32)
    quad = lax.dot_general(ones_row, prod, (((1,), (1,)), ((), ())),
                           preferred_element_type=jnp.float32)              # (1, TB)
    o_ref[...] = (quad + c_ref[0, 0]).astype(o_ref.dtype)


@functools.partial(jax.jit, static_argnames=("tb", "out_dtype"))
def pn_neuron_forward(x, W, mask, *, tb=None, out_dtype=jnp.float32):
    """Forward pass matching PN_Neuron.forward: x (B, D) -> (B, 1), f32 output by default."""
    B, D = x.shape
    w_m = (W * mask).astype(jnp.float32)           # mask applied once; XLA fuses this
    A = w_m[:D, :D]                                # (D, D) quadratic part
    b = (w_m[:D, D] + w_m[D, :D]).reshape(1, D)    # (1, D) linear part: column AND bottom row
                                                   # folded, so any mask (not only triu) is correct
    c = w_m[D:D + 1, D:D + 1]                      # (1, 1) constant part

    # ---- batch tile selection ------------------------------------------------
    # Large tiles: per-grid-step overhead dominates the tiny per-step DMA at D ~ 4.
    # Keep >= 2 steps when B allows (v7x megacore sharding of the "parallel" axis),
    # round to a multiple of 128 (lane-dense output / (8,128) rule), cap at 16K rows
    # since a (tile_b, D) f32 block lane-pads D -> 128 in VMEM (8 MiB/buffer at 16K).
    if tb is None:
        tb = pl.cdiv(B, 8)
    tile_b = min(_round_up(max(min(tb, B), 1), 128), 16384)
    grid = (pl.cdiv(B, tile_b),)
    b_pad = grid[0] * tile_b                       # padded lane extent of the *output* only;
                                                   # x itself is never padded/copied in HBM

    out = pl.pallas_call(
        pn_neuron_kernel,
        out_shape=jax.ShapeDtypeStruct((1, b_pad), out_dtype),
        grid=grid,
        in_specs=[
            pl.BlockSpec((D, D), lambda i: (0, 0)),         # weights stay resident
            pl.BlockSpec((1, D), lambda i: (0, 0)),
            pl.BlockSpec(memory_space=pltpu.MemorySpace.SMEM),
            pl.BlockSpec((tile_b, D), lambda i: (i, 0)),    # streamed batch tile (ragged
                                                            # boundary handled by Pallas masking)
        ],
        out_specs=pl.BlockSpec((1, tile_b), lambda i: (0, i)),
        compiler_params=pltpu.CompilerParams(
            dimension_semantics=("parallel",),              # shard batch grid across TCs (v7x)
            vmem_limit_bytes=48 * 1024 * 1024,              # explicit headroom for 16K tiles
        ),
    )(A, b, c, x)
    return out[:, :B].T                            # (B, 1); garbage boundary lanes dropped


def init_pn_params(key, in_features):
    """Deterministic parameter init mirroring PN_Neuron.__init__."""
    d = in_features + 1
    W = jax.random.normal(key, (d, d), dtype=jnp.float32)
    mask = jnp.triu(jnp.ones((d, d), dtype=jnp.float32))    # upper-tri incl. diagonal
    W = W * mask                                            # zero strict lower triangle
    return W, mask


# TODO(synk): symbolic_forward (sympy) and the W.register_hook gradient mask are
# training/symbolic utilities with no forward-pass Pallas equivalent; not translated.


if __name__ == "__main__":
    key = jax.random.PRNGKey(0)
    k_w, k_x, k_x2 = jax.random.split(key, 3)

    in_features = 4
    batch = 8

    W, mask = init_pn_params(k_w, in_features)
    x = jax.random.normal(k_x, (batch, in_features), dtype=jnp.float32)

    # Exact (pure-VPU) reference for z W z^T with z = [x, 1].
    def ref_forward(xv):
        z = jnp.concatenate([xv, jnp.ones((xv.shape[0], 1), xv.dtype)], axis=1)
        w_m = W * mask
        return jnp.sum(z[:, :, None] * w_m[None, :, :] * z[:, None, :], axis=(1, 2))[:, None]

    out = jax.block_until_ready(pn_neuron_forward(x, W, mask))
    assert out.shape == (batch, 1)
    assert jnp.allclose(out, ref_forward(x), atol=1e-4, rtol=1e-4)

    # Ragged multi-tile path: grid of 3 tiles of 128 lanes with a masked boundary block.
    batch2 = 300
    x2 = jax.random.normal(k_x2, (batch2, in_features), dtype=jnp.float32)
    out2 = jax.block_until_ready(pn_neuron_forward(x2, W, mask, tb=128))
    assert out2.shape == (batch2, 1)
    assert jnp.allclose(out2, ref_forward(x2), atol=1e-4, rtol=1e-4)

    print("KERNEL_OK")
</pallas_src>

<mosaic_0001>
module attributes {stable_mosaic.version = 11 : i64} {
  func.func @pn_neuron_kernel(%arg0: i32, %arg1: memref<4x4xf32, #tpu.memory_space<vmem>>, %arg2: memref<1x4xf32, #tpu.memory_space<vmem>>, %arg3: memref<1x1xf32, #tpu.memory_space<smem>>, %arg4: memref<128x4xf32, #tpu.memory_space<vmem>>, %arg5: memref<1x128xf32, #tpu.memory_space<vmem>>) attributes {dimension_semantics = [#tpu.dimension_semantics<parallel>], iteration_bounds = array<i64: 1>, scalar_prefetch = 0 : i64, scratch_operands = 0 : i64, tpu.core_type = #tpu.core_type<tc>, window_params = [{pipeline_mode = #tpu.pipeline_mode<synchronous>, transform_indices = @transform_0, window_bounds = array<i64: 4, 4>}, {pipeline_mode = #tpu.pipeline_mode<synchronous>, transform_indices = @transform_1, window_bounds = array<i64: 1, 4>}, {transform_indices = @transform_2, window_bounds = array<i64: 1, 1>}, {transform_indices = @transform_3, window_bounds = array<i64: 128, 4>}, {transform_indices = @transform_4, window_bounds = array<i64: 1, 128>}]} {
    %c0 = arith.constant 0 : index
    %c0_0 = arith.constant 0 : index
    %0 = vector.load %arg4[%c0, %c0_0] : memref<128x4xf32, #tpu.memory_space<vmem>>, vector<128x4xf32>
    %c0_1 = arith.constant 0 : index
    %c0_2 = arith.constant 0 : index
    %1 = vector.load %arg1[%c0_1, %c0_2] : memref<4x4xf32, #tpu.memory_space<vmem>>, vector<4x4xf32>
    %cst = arith.constant dense<0.000000e+00> : vector<128x4xf32>
    %2 = tpu.matmul %0, %1, %cst {dimension_numbers = #tpu.dot_dimension_numbers<[1], [0], [0], [1], [0, 0, 1, 1], [], []>} : vector<128x4xf32>, vector<4x4xf32>, vector<128x4xf32> -> vector<128x4xf32>
    %c0_3 = arith.constant 0 : index
    %c0_4 = arith.constant 0 : index
    %3 = vector.load %arg2[%c0_3, %c0_4] : memref<1x4xf32, #tpu.memory_space<vmem>>, vector<1x4xf32>
    %4 = vector.broadcast %3 : vector<1x4xf32> to vector<128x4xf32>
    %5 = arith.addf %2, %4 : vector<128x4xf32>
    %6 = arith.mulf %0, %5 : vector<128x4xf32>
    %cst_5 = arith.constant 1.000000e+00 : f32
    %7 = vector.broadcast %cst_5 : f32 to vector<1x4xf32>
    %cst_6 = arith.constant dense<0.000000e+00> : vector<1x128xf32>
    %8 = tpu.matmul %7, %6, %cst_6 {dimension_numbers = #tpu.dot_dimension_numbers<[1], [1], [0], [0], [0, 0, 1, 0], [], []>} : vector<1x4xf32>, vector<128x4xf32>, vector<1x128xf32> -> vector<1x128xf32>
    %c0_7 = arith.constant 0 : index
    %c0_8 = arith.constant 0 : index
    %9 = memref.load %arg3[%c0_7, %c0_8] : memref<1x1xf32, #tpu.memory_space<smem>>
    %10 = vector.broadcast %9 : f32 to vector<1x128xf32>
    %11 = arith.addf %8, %10 : vector<1x128xf32>
    %c0_9 = arith.constant 0 : index
    %c0_10 = arith.constant 0 : index
    %12 = vector.load %arg5[%c0_9, %c0_10] : memref<1x128xf32, #tpu.memory_space<vmem>>, vector<1x128xf32>
    tpu.vector_store %arg5[%c0_9, %c0_10], %11 {strides = array<i32>} : memref<1x128xf32, #tpu.memory_space<vmem>>, vector<1x128xf32>,
    return
  }
  func.func @transform_0(%arg0: i32) -> (i32, i32) {
    %c0_i32 = arith.constant 0 : i32
    %c0_i32_0 = arith.constant 0 : i32
    %c0_i32_1 = arith.constant 0 : i32
    return %c0_i32, %c0_i32_0 : i32, i32
  }
  func.func @transform_1(%arg0: i32) -> (i32, i32) {
    %c0_i32 = arith.constant 0 : i32
    %c0_i32_0 = arith.constant 0 : i32
    %c0_i32_1 = arith.constant 0 : i32
    return %c0_i32, %c0_i32_0 : i32, i32
  }
  func.func @transform_2(%arg0: i32) -> (i32, i32) {
    %c0_i32 = arith.constant 0 : i32
    %c0_i32_0 = arith.constant 0 : i32
    %c0_i32_1 = arith.constant 0 : i32
    return %c0_i32, %c0_i32_0 : i32, i32
  }
  func.func @transform_3(%arg0: i32) -> (i32, i32) {
    %c0_i32 = arith.constant 0 : i32
    %c0_i32_0 = arith.constant 0 : i32
    return %arg0, %c0_i32 : i32, i32
  }
  func.func @transform_4(%arg0: i32) -> (i32, i32) {
    %c0_i32 = arith.constant 0 : i32
    %c0_i32_0 = arith.constant 0 : i32
    return %c0_i32, %arg0 : i32, i32
  }
}

</mosaic_0001>

<llo_original>
// kernel: mul.1
$region0: #{mul.1}
  #allocation4 [shape = 's32[1]{0}', space=sflag, size = 0x4, scoped, tag = 'scoped memory for mul.1']
  %s0 = inlined_call_operand.hbm [shape: f32[5,5], index: 0, kind: input, shape index: {}]
  %s1 = inlined_call_operand.hbm [shape: f32[5,5], index: 1, kind: input, shape index: {}]
  %s2 = inlined_call_operand.vmem [shape: f32[5,5], index: 2, kind: output, shape index: {}]
  $region1: #{mul.1} parent=0
    #allocation0 [shape = 'u8[4096]{0}', space=vmem, size = 0x1000, scoped, tag = 'operand span for operand 0']
    #allocation1 [shape = 's32[1]{0}', space=sflag, size = 0x4, scoped, tag = 'scoped memory for mul.1']
    #allocation2 [shape = 'u8[4096]{0}', space=vmem, size = 0x1000, scoped, tag = 'operand span for operand 1']
    #allocation3 [shape = 's32[1]{0}', space=sflag, size = 0x4, scoped, tag = 'scoped memory for mul.1']
    %3 = vsyncpa [#allocation1], 0
    %4 = vsyncpa [#allocation3], 0
    %s6 = ssub.s32 128, 128
    %7 = vsyncadd [#allocation1], %s6
    %s9 = sshll.u32 [#allocation0], 4
    %s10 = int_to_ptr.vmem [resolvable:$true] %s9
    %12 = dma.hbm_to_vmem [thread:$0]  %s0, 128, %s10, [#allocation1]
    %s14 = ssub.s32 128, 128
    %15 = vsyncadd [#allocation3], %s14
    %s17 = sshll.u32 [#allocation2], 4
    %s18 = int_to_ptr.vmem [resolvable:$true] %s17
    %20 = dma.hbm_to_vmem [thread:$0]  %s1, 128, %s18, [#allocation3]
    %21 = dma.done [#allocation1], 128
    %22 = dma.done [#allocation3], 128
    %v23 = vld [vmem:[#allocation0] sm:$0x1f]
    %v24 = vld [vmem:[#allocation2] sm:$0x1f]
    %25 = xla_tuple %v23, %v24
    %26 = xla_tuple %25
    %v27 = vmul.f32 %v23, %v24
    %28 = xla_tuple %v27
    %29 = vst [vmem:[%s2] sm:$0xff] %v27
    %30 = vsyncpa [#allocation1], 1
    %31 = vsyncpa [#allocation3], 1

// kernel: pn_neuron_forward.1
$region0: #{pn_neuron_forward.1}
  #allocation0 [shape = 'u32[]', space=smem, size = 0x4, offset = 0x4, fixed_abs, tag = 'smem constant byte address 0x4 - core index']
  #allocation1 [shape = 'u32[144,128]{1,0:T(1,128)}', space=vmem, size = 0x12000, scoped, tag = 'internal scratch']
  #allocation2 [shape = 'f32[1,1]{1,0:T(1,128)S(6)}', space=smem, size = 0x200, scoped, tag = 'scoped memory for pn_neuron_forward.1']
  %s0 = inlined_call_operand.vmem [shape: f32[4,4], index: 0, kind: input, shape index: {}]
  %s1 = inlined_call_operand.vmem [shape: f32[1,4], index: 1, kind: input, shape index: {}]
  %s2 = inlined_call_operand.<no memory space> [shape: f32[1,1], index: 2, kind: input, shape index: {}]
  %s3 = inlined_call_operand.vmem [shape: f32[8,4], index: 3, kind: input, shape index: {}]
  %s4 = inlined_call_operand.vmem [shape: f32[1,128], index: 4, kind: output, shape index: {}]
  %s5 = sld [smem:[#allocation0]]
  $region26: #{pn_neuron_forward.1} parent=0
    _
  %s7 = ssub.s32 1, %s5
  %s8 = scalar_select 0, %s7, %s5
  %9 = sst [smem:[#allocation2]] %s2
  // Predicated region
  $region2: #{pn_neuron_forward.1} parent=0 // pred_check
    _
  $region3: #{pn_neuron_forward.1} parent=0 // pred_check_branch
    %11 = sbr.rel (0) target = $region5
  $region4: #{pn_neuron_forward.1} parent=0 // pred_region
    _
  $region5: #{pn_neuron_forward.1} parent=0 // pred_fallthru
    _
  // Predicated region
  $region6: #{pn_neuron_forward.1} parent=0 // pred_check
    _
  $region7: #{pn_neuron_forward.1} parent=0 // pred_check_branch
    %13 = sbr.rel (0) target = $region9
  $region8: #{pn_neuron_forward.1} parent=0 // pred_region
    _
  $region9: #{pn_neuron_forward.1} parent=0 // pred_fallthru
    _
  // Predicated region
  $region10: #{pn_neuron_forward.1} parent=0 // pred_check
    _
  $region11: #{pn_neuron_forward.1} parent=0 // pred_check_branch
    %15 = sbr.rel (0) target = $region13
  $region12: #{pn_neuron_forward.1} parent=0 // pred_region
    _
  $region13: #{pn_neuron_forward.1} parent=0 // pred_fallthru
    _
  // Predicated region
  $region14: #{pn_neuron_forward.1} parent=0 // pred_check
    _
  $region15: #{pn_neuron_forward.1} parent=0 // pred_check_branch
    %17 = sbr.rel (0) target = $region17
  $region16: #{pn_neuron_forward.1} parent=0 // pred_region
    _
  $region17: #{pn_neuron_forward.1} parent=0 // pred_fallthru
    _
  %v18 = vld [vmem:[%s3] sm:$0xff]
  %v19 = vld [vmem:[%s3 + $0x8] sm:$0xff]
  %v20 = vld [vmem:[%s3 + $0x10] sm:$0xff]
  %v21 = vld [vmem:[%s3 + $0x18] sm:$0xff]
  %v22 = vld [vmem:[%s3 + $0x20] sm:$0xff]
  %v23 = vld [vmem:[%s3 + $0x28] sm:$0xff]
  %v24 = vld [vmem:[%s3 + $0x30] sm:$0xff]
  %v25 = vld [vmem:[%s3 + $0x38] sm:$0xff]
  %v26 = vld [vmem:[%s3 + $0x40] sm:$0xff]
  %v27 = vld [vmem:[%s3 + $0x48] sm:$0xff]
  %v28 = vld [vmem:[%s3 + $0x50] sm:$0xff]
  %v29 = vld [vmem:[%s3 + $0x58] sm:$0xff]
  %v30 = vld [vmem:[%s3 + $0x60] sm:$0xff]
  %v31 = vld [vmem:[%s3 + $0x68] sm:$0xff]
  %v32 = vld [vmem:[%s3 + $0x70] sm:$0xff]
  %v33 = vld [vmem:[%s3 + $0x78] sm:$0xff]
  %v34 = vld [vmem:[%s0] sm:$0xf]
  %v35 = vld [vmem:[%s1] sm:$0x1]
  %v37 = vlaneseq
  %v38 = vshrl.u32 %v37, 7
  %v39 = vsub.s32 0, %v38
  %v40 = vrot.slane %v35, %v39
  %vm42 = vcmask 31744
  %v44 = vsel %vm42, %v18, 0
  %v47 = vsel %vm42, %v19, 0
  %v50 = vsel %vm42, %v20, 0
  %v53 = vsel %vm42, %v21, 0
  %v56 = vsel %vm42, %v22, 0
  %v59 = vsel %vm42, %v23, 0
  %v62 = vsel %vm42, %v24, 0
  %v65 = vsel %vm42, %v25, 0
  %v68 = vsel %vm42, %v26, 0
  %v71 = vsel %vm42, %v27, 0
  %v74 = vsel %vm42, %v28, 0
  %v77 = vsel %vm42, %v29, 0
  %v80 = vsel %vm42, %v30, 0
  %v83 = vsel %vm42, %v31, 0
  %v86 = vsel %vm42, %v32, 0
  %v89 = vsel %vm42, %v33, 0
  %vm91 = vcmask 1043456
  %v93 = vsel %vm91, %v34, 0
  %95 = vmatprep.subr.mxu0 0.0
  %96 = vmatpush1.msra.mxu0 %v93
  %97 = vmatprep.subr.mxu0 0.0
  %98 = vmatpush1.msra.mxu0 0.0
  %99 = vmatprep.subr.mxu0 0.0
  %100 = vmatpush1.msra.mxu0 0.0
  %101 = vmatprep.subr.mxu0 0.0
  %102 = vmatpush1.msra.mxu0 0.0
  %103 = vmatprep.subr.mxu0 0.0
  %104 = vmatpush1.msra.mxu0 0.0
  %105 = vmatprep.subr.mxu0 0.0
  %106 = vmatpush1.msra.mxu0 0.0
  %107 = vmatprep.subr.mxu0 0.0
  %108 = vmatpush1.msra.mxu0 0.0
  %109 = vmatprep.subr.mxu0 0.0
  %110 = vmatpush1.msra.mxu0 0.0
  %111 = vmatprep.subr.mxu0 0.0
  %112 = vmatpush1.msra.mxu0 0.0
  %113 = vmatprep.subr.mxu0 0.0
  %114 = vmatpush1.msra.mxu0 0.0
  %115 = vmatprep.subr.mxu0 0.0
  %116 = vmatpush1.msra.mxu0 0.0
  %117 = vmatprep.subr.mxu0 0.0
  %118 = vmatpush1.msra.mxu0 0.0
  %119 = vmatprep.subr.mxu0 0.0
  %120 = vmatpush1.msra.mxu0 0.0
  %121 = vmatprep.subr.mxu0 0.0
  %122 = vmatpush1.msra.mxu0 0.0
  %123 = vmatprep.subr.mxu0 0.0
  %124 = vmatpush1.msra.mxu0 0.0
  %125 = vmatprep.subr.mxu0 0.0
  %126 = vmatpush1.msra.mxu0 0.0
  %127 = vmatprep.subr.mxu0 0.0
  %128 = vmatpush1.msra.mxu0 0.0
  %129 = vmatprep.subr.mxu0 0.0
  %130 = vmatpush1.msra.mxu0 0.0
  %131 = vmatprep.subr.mxu0 0.0
  %132 = vmatpush1.msra.mxu0 0.0
  %133 = vmatprep.subr.mxu0 0.0
  %134 = vmatpush1.msra.mxu0 0.0
  %135 = vmatprep.subr.mxu0 0.0
  %136 = vmatpush1.msra.mxu0 0.0
  %137 = vmatprep.subr.mxu0 0.0
  %138 = vmatpush1.msra.mxu0 0.0
  %139 = vmatprep.subr.mxu0 0.0
  %140 = vmatpush1.msra.mxu0 0.0
  %141 = vmatprep.subr.mxu0 0.0
  %142 = vmatpush1.msra.mxu0 0.0
  %143 = vmatprep.subr.mxu0 0.0
  %144 = vmatpush1.msra.mxu0 0.0
  %145 = vmatprep.subr.mxu0 0.0
  %146 = vmatpush1.msra.mxu0 0.0
  %147 = vmatprep.subr.mxu0 0.0
  %148 = vmatpush1.msra.mxu0 0.0
  %149 = vmatprep.subr.mxu0 0.0
  %150 = vmatpush1.msra.mxu0 0.0
  %151 = vmatprep.subr.mxu0 0.0
  %152 = vmatpush1.msra.mxu0 0.0
  %153 = vmatprep.subr.mxu0 0.0
  %154 = vmatpush1.msra.mxu0 0.0
  %155 = vmatprep.subr.mxu0 0.0
  %156 = vmatpush1.msra.mxu0 0.0
  %157 = vmatprep.subr.mxu0 0.0
  %158 = vmatpush1.msra.mxu0 0.0
  %159 = vmatprep.mubr.f32.mxu0 0.0
  %160 = vmatmul.mubr.f32.gmra.mrb[0].mxu0 %v44
  %v161 = vpop.f32.mrb[0].mxu0
  %v162 = vadd.f32 %v40, %v161
  %v163 = vpop.f32.mrb[0].mxu0
  %164 = vmatprep.mubr.f32.mxu0 0.0
  %165 = vmatmul.mubr.f32.gmra.mrb[0].mxu0 %v47
  %v166 = vpop.f32.mrb[0].mxu0
  %v167 = vadd.f32 %v40, %v166
  %v168 = vpop.f32.mrb[0].mxu0
  %169 = vmatprep.mubr.f32.mxu0 0.0
  %170 = vmatmul.mubr.f32.gmra.mrb[0].mxu0 %v50
  %v171 = vpop.f32.mrb[0].mxu0
  %v172 = vadd.f32 %v40, %v171
  %v173 = vpop.f32.mrb[0].mxu0
  %174 = vmatprep.mubr.f32.mxu0 0.0
  %175 = vmatmul.mubr.f32.gmra.mrb[0].mxu0 %v53
  %v176 = vpop.f32.mrb[0].mxu0
  %v177 = vadd.f32 %v40, %v176
  %v178 = vpop.f32.mrb[0].mxu0
  %179 = vmatprep.mubr.f32.mxu0 0.0
  %180 = vmatmul.mubr.f32.gmra.mrb[0].mxu0 %v56
  %v181 = vpop.f32.mrb[0].mxu0
  %v182 = vadd.f32 %v40, %v181
  %v183 = vpop.f32.mrb[0].mxu0
  %184 = vmatprep.mubr.f32.mxu0 0.0
  %185 = vmatmul.mubr.f32.gmra.mrb[0].mxu0 %v59
  %v186 = vpop.f32.mrb[0].mxu0
  %v187 = vadd.f32 %v40, %v186
  %v188 = vpop.f32.mrb[0].mxu0
  %189 = vmatprep.mubr.f32.mxu0 0.0
  %190 = vmatmul.mubr.f32.gmra.mrb[0].mxu0 %v62
  %v191 = vpop.f32.mrb[0].mxu0
  %v192 = vadd.f32 %v40, %v191
  %v193 = vpop.f32.mrb[0].mxu0
  %194 = vmatprep.mubr.f32.mxu0 0.0
  %195 = vmatmul.mubr.f32.gmra.mrb[0].mxu0 %v65
  %v196 = vpop.f32.mrb[0].mxu0
  %v197 = vadd.f32 %v40, %v196
  %v198 = vpop.f32.mrb[0].mxu0
  %199 = vmatprep.mubr.f32.mxu0 0.0
  %200 = vmatmul.mubr.f32.gmra.mrb[0].mxu0 %v68
  %v201 = vpop.f32.mrb[0].mxu0
  %v202 = vadd.f32 %v40, %v201
  %v203 = vpop.f32.mrb[0].mxu0
  %204 = vmatprep.mubr.f32.mxu0 0.0
  %205 = vmatmul.mubr.f32.gmra.mrb[0].mxu0 %v71
  %v206 = vpop.f32.mrb[0].mxu0
  %v207 = vadd.f32 %v40, %v206
  %v208 = vpop.f32.mrb[0].mxu0
  %209 = vmatprep.mubr.f32.mxu0 0.0
  %210 = vmatmul.mubr.f32.gmra.mrb[0].mxu0 %v74
  %v211 = vpop.f32.mrb[0].mxu0
  %v212 = vadd.f32 %v40, %v211
  %v213 = vpop.f32.mrb[0].mxu0
  %214 = vmatprep.mubr.f32.mxu0 0.0
  %215 = vmatmul.mubr.f32.gmra.mrb[0].mxu0 %v77
  %v216 = vpop.f32.mrb[0].mxu0
  %v217 = vadd.f32 %v40, %v216
  %v218 = vpop.f32.mrb[0].mxu0
  %219 = vmatprep.mubr.f32.mxu0 0.0
  %220 = vmatmul.mubr.f32.gmra.mrb[0].mxu0 %v80
  %v221 = vpop.f32.mrb[0].mxu0
  %v222 = vadd.f32 %v40, %v221
  %v223 = vpop.f32.mrb[0].mxu0
  %224 = vmatprep.mubr.f32.mxu0 0.0
  %225 = vmatmul.mubr.f32.gmra.mrb[0].mxu0 %v83
  %v226 = vpop.f32.mrb[0].mxu0
  %v227 = vadd.f32 %v40, %v226
  %v228 = vpop.f32.mrb[0].mxu0
  %229 = vmatprep.mubr.f32.mxu0 0.0
  %230 = vmatmul.mubr.f32.gmra.mrb[0].mxu0 %v86
  %v231 = vpop.f32.mrb[0].mxu0
  %v232 = vadd.f32 %v40, %v231
  %v233 = vpop.f32.mrb[0].mxu0
  %234 = vmatprep.mubr.f32.mxu0 0.0
  %235 = vmatmul.mubr.f32.gmra.mrb[0].mxu0 %v89
  %v236 = vpop.f32.mrb[0].mxu0
  %v237 = vadd.f32 %v40, %v236
  %v238 = vpop.f32.mrb[0].mxu0
  %239 = vdwg.mxu0
  %v240 = vmul.f32 %v18, %v162
  %v241 = vmul.f32 %v19, %v167
  %v242 = vmul.f32 %v20, %v172
  %v243 = vmul.f32 %v21, %v177
  %v244 = vmul.f32 %v22, %v182
  %v245 = vmul.f32 %v23, %v187
  %v246 = vmul.f32 %v24, %v192
  %v247 = vmul.f32 %v25, %v197
  %v248 = vmul.f32 %v26, %v202
  %v249 = vmul.f32 %v27, %v207
  %v250 = vmul.f32 %v28, %v212
  %v251 = vmul.f32 %v29, %v217
  %v252 = vmul.f32 %v30, %v222
  %v253 = vmul.f32 %v31, %v227
  %v254 = vmul.f32 %v32, %v232
  %v255 = vmul.f32 %v33, %v237
  %s256 = sld [smem:[#allocation2]]
  %v257 = vstv %s256
  %v259 = vsel %vm42, 1.0, 0
  %v262 = vsel %vm42, %v240, 0
  %v265 = vsel %vm42, %v241, 0
  %v268 = vsel %vm42, %v242, 0
  %v271 = vsel %vm42, %v243, 0
  %v274 = vsel %vm42, %v244, 0
  %v277 = vsel %vm42, %v245, 0
  %v280 = vsel %vm42, %v246, 0
  %v283 = vsel %vm42, %v247, 0
  %v286 = vsel %vm42, %v248, 0
  %v289 = vsel %vm42, %v249, 0
  %v292 = vsel %vm42, %v250, 0
  %v295 = vsel %vm42, %v251, 0
  %v298 = vsel %vm42, %v252, 0
  %v301 = vsel %vm42, %v253, 0
  %v304 = vsel %vm42, %v254, 0
  %v307 = vsel %vm42, %v255, 0
  %309 = vmatprep.subr.mxu0 0.0
  %310 = vmatpush1.xpose.msra.mxu0 %v262
  %311 = vmatprep.subr.mxu0 0.0
  %312 = vmatpush1.xpose.msra.mxu0 %v265
  %313 = vmatprep.subr.mxu0 0.0
  %314 = vmatpush1.xpose.msra.mxu0 %v268
  %315 = vmatprep.subr.mxu0 0.0
  %316 = vmatpush1.xpose.msra.mxu0 %v271
  %317 = vmatprep.subr.mxu0 0.0
  %318 = vmatpush1.xpose.msra.mxu0 %v274
  %319 = vmatprep.subr.mxu0 0.0
  %320 = vmatpush1.xpose.msra.mxu0 %v277
  %321 = vmatprep.subr.mxu0 0.0
  %322 = vmatpush1.xpose.msra.mxu0 %v280
  %323 = vmatprep.subr.mxu0 0.0
  %324 = vmatpush1.xpose.msra.mxu0 %v283
  %325 = vmatprep.subr.mxu0 0.0
  %326 = vmatpush1.xpose.msra.mxu0 %v286
  %327 = vmatprep.subr.mxu0 0.0
  %328 = vmatpush1.xpose.msra.mxu0 %v289
  %329 = vmatprep.subr.mxu0 0.0
  %330 = vmatpush1.xpose.msra.mxu0 %v292
  %331 = vmatprep.subr.mxu0 0.0
  %332 = vmatpush1.xpose.msra.mxu0 %v295
  %333 = vmatprep.subr.mxu0 0.0
  %334 = vmatpush1.xpose.msra.mxu0 %v298
  %335 = vmatprep.subr.mxu0 0.0
  %336 = vmatpush1.xpose.msra.mxu0 %v301
  %337 = vmatprep.subr.mxu0 0.0
  %338 = vmatpush1.xpose.msra.mxu0 %v304
  %339 = vmatprep.subr.mxu0 0.0
  %340 = vmatpush1.xpose.msra.mxu0 %v307
  %341 = vmatprep.subr.mxu0 0.0
  %342 = vmatpush1.xpose.msra.mxu0 0.0
  %343 = vmatprep.subr.mxu0 0.0
  %344 = vmatpush1.xpose.msra.mxu0 0.0
  %345 = vmatprep.subr.mxu0 0.0
  %346 = vmatpush1.xpose.msra.mxu0 0.0
  %347 = vmatprep.subr.mxu0 0.0
  %348 = vmatpush1.xpose.msra.mxu0 0.0
  %349 = vmatprep.subr.mxu0 0.0
  %350 = vmatpush1.xpose.msra.mxu0 0.0
  %351 = vmatprep.subr.mxu0 0.0
  %352 = vmatpush1.xpose.msra.mxu0 0.0
  %353 = vmatprep.subr.mxu0 0.0
  %354 = vmatpush1.xpose.msra.mxu0 0.0
  %355 = vmatprep.subr.mxu0 0.0
  %356 = vmatpush1.xpose.msra.mxu0 0.0
  %357 = vmatprep.subr.mxu0 0.0
  %358 = vmatpush1.xpose.msra.mxu0 0.0
  %359 = vmatprep.subr.mxu0 0.0
  %360 = vmatpush1.xpose.msra.mxu0 0.0
  %361 = vmatprep.subr.mxu0 0.0
  %362 = vmatpush1.xpose.msra.mxu0 0.0
  %363 = vmatprep.subr.mxu0 0.0
  %364 = vmatpush1.xpose.msra.mxu0 0.0
  %365 = vmatprep.subr.mxu0 0.0
  %366 = vmatpush1.xpose.msra.mxu0 0.0
  %367 = vmatprep.subr.mxu0 0.0
  %368 = vmatpush1.xpose.msra.mxu0 0.0
  %369 = vmatprep.subr.mxu0 0.0
  %370 = vmatpush1.xpose.msra.mxu0 0.0
  %371 = vmatprep.subr.mxu0 0.0
  %372 = vmatpush1.xpose.msra.mxu0 0.0
  %373 = vmatprep.mubr.f32.mxu0 0.0
  %374 = vmatmul.mubr.f32.gmra.mrb[0].mxu0 %v259
  %v375 = vpop.f32.mrb[0].mxu0
  %v376 = vadd.f32 %v257, %v375
  %v377 = vpop.f32.mrb[0].mxu0
  %378 = vdwg.mxu0
  %379 = vst [vmem:[%s4] sm:$0x1] %v376
  // Predicated region
  $region18: #{pn_neuron_forward.1} parent=0 // pred_check
    _
  $region19: #{pn_neuron_forward.1} parent=0 // pred_check_branch
    %381 = sbr.rel (0) target = $region21
  $region20: #{pn_neuron_forward.1} parent=0 // pred_region
    _
  $region21: #{pn_neuron_forward.1} parent=0 // pred_fallthru
    _
  // Predicated region
  $region22: #{pn_neuron_forward.1} parent=0 // pred_check
    _
  $region23: #{pn_neuron_forward.1} parent=0 // pred_check_branch
    %383 = sbr.rel (0) target = $region25
  $region24: #{pn_neuron_forward.1} parent=0 // pred_region
    _
  $region25: #{pn_neuron_forward.1} parent=0 // pred_fallthru
    _

</llo_original>
